<compile_context>
chip_gen: v5e
topology: v5e:2x2
jax: 0.10.0
libtpu: 0.0.40
codegen_flags: <defaults>
</compile_context>

<pallas_src>
import math

import jax
import jax.numpy as jnp
from jax import lax
from jax.experimental import pallas as pl
from jax.experimental.pallas import tpu as pltpu


# ----------------------------------------------------------------------------
# Kernels
# ----------------------------------------------------------------------------
def _fa_kernel_resident(x_ref, w1_ref, w2c_ref, o_ref):
    """Fused forward for one batch tile, W1 fully resident in VMEM.

    x_ref:   (tb, D_in)   batch tile (rows on sublanes, features on lanes)
    w1_ref:  (H, D_in)    layer-1 weights, nn.Linear layout (out, in)
    w2c_ref: (H, 1)       layer-2 weights as a column, pre-scaled by 1/sqrt(H)
    o_ref:   (1, 1, tb)   lane-dense predictions for this batch tile
    """
    # Contraction on the last (lane) dim of BOTH operands -> MXU transposed-RHS
    # matmul, no wrapper transpose of X.  Output (H, tb), f32 accumulation.
    pre = lax.dot_general(
        w1_ref[...], x_ref[...],
        dimension_numbers=(((1,), (1,)), ((), ())),
        preferred_element_type=jnp.float32)
    # sigmoid(x) == 0.5*tanh(0.5*x)+0.5 : one EUP push instead of exp+divide.
    hidden = 0.5 * jnp.tanh(0.5 * pre) + 0.5
    # Layer 2: VPU broadcast-multiply + XLU sublane reduce -> (1, tb).
    pred = jnp.sum(hidden * w2c_ref[...], axis=0, keepdims=True)
    o_ref[...] = pred[None].astype(o_ref.dtype)


def _fa_kernel_ktiled(x_ref, w1_ref, w2c_ref, o_ref, acc_ref):
    """K-tiled variant: W1/X streamed along D_in, (H, tb) f32 accumulator."""
    k = pl.program_id(1)

    @pl.when(k == 0)
    def _():
        acc_ref[...] = jnp.zeros_like(acc_ref)

    acc_ref[...] += lax.dot_general(
        w1_ref[...], x_ref[...],
        dimension_numbers=(((1,), (1,)), ((), ())),
        preferred_element_type=jnp.float32)

    @pl.when(k == pl.num_programs(1) - 1)
    def _():
        hidden = 0.5 * jnp.tanh(0.5 * acc_ref[...]) + 0.5
        pred = jnp.sum(hidden * w2c_ref[...], axis=0, keepdims=True)
        o_ref[...] = pred[None].astype(o_ref.dtype)


# ----------------------------------------------------------------------------
# Host-side helpers
# ----------------------------------------------------------------------------
def _round_up(x, m):
    return ((x + m - 1) // m) * m


def _vmem_budget_bytes():
    cap = 0
    try:
        info = pltpu.get_tpu_info()
        cap = int(getattr(info, "vmem_capacity_bytes", 0) or 0)
    except Exception:
        cap = 0
    if cap <= 0:
        cap = 64 * 1024 * 1024  # conservative default: v7x has the smallest VMEM
    # ~25% headroom for Mosaic scratch / epilogue buffers; never ask for >100MiB
    # even on 128 MiB parts.
    return min((cap * 3) // 4, 100 * 1024 * 1024)


def _pick_batch_tile(B):
    """>=2 tiles whenever B > 8 (v7x dual-TC), 8-aligned, 128-aligned when
    large (full MXU / unmasked store tiles), capped at 512 (~85% roofline)."""
    if B <= 8:
        return _round_up(max(B, 1), 8)
    half = -(-B // 2)
    want = _round_up(half, 8)
    if want >= 192:
        want = _round_up(half, 128)
    return min(want, 512)


def _compiler_params(semantics, est, budget):
    kwargs = dict(dimension_semantics=semantics)
    if est > (16 << 20):  # only raise the scoped limit when actually needed
        kwargs["vmem_limit_bytes"] = int(budget)
    return pltpu.CompilerParams(**kwargs)


def _forward_resident(x_in, w1_in, w2_col, B, d_in, H, block_b, budget,
                      in_bytes):
    b_pad = _round_up(B, block_b)
    if b_pad != B:
        # Padded rows give sigmoid(0)=0.5 in padded output columns, which are
        # sliced off below and cannot contaminate real rows.
        x_in = jnp.pad(x_in, ((0, b_pad - B), (0, 0)))
    num_tiles = b_pad // block_b

    est = (H * d_in * in_bytes              # W1 (single-buffered)
           + 2 * block_b * d_in * in_bytes  # X tiles (double-buffered)
           + 2 * H * block_b * 4            # pre + hidden f32 intermediates
           + H * 4                          # W2 column
           + 2 * block_b * 4)               # output tiles
    params = _compiler_params(("parallel",), est, budget)

    def build(single_buffer_invariants):
        inv_kwargs = (dict(pipeline_mode=pl.Buffered(1))
                      if single_buffer_invariants else {})
        return pl.pallas_call(
            _fa_kernel_resident,
            out_shape=jax.ShapeDtypeStruct((num_tiles, 1, block_b), jnp.float32),
            grid_spec=pltpu.PrefetchScalarGridSpec(
                num_scalar_prefetch=0,
                grid=(num_tiles,),
                in_specs=[
                    pl.BlockSpec((block_b, d_in), lambda i: (i, 0)),      # X tile
                    pl.BlockSpec((H, d_in), lambda i: (0, 0), **inv_kwargs),  # W1
                    pl.BlockSpec((H, 1), lambda i: (0, 0), **inv_kwargs),     # W2
                ],
                out_specs=pl.BlockSpec((1, 1, block_b), lambda i: (i, 0, 0)),
            ),
            compiler_params=params,
        )

    try:
        out = build(True)(x_in, w1_in, w2_col)
    except Exception:
        # Fallback if this JAX build rejects single-buffered pipeline_mode.
        out = build(False)(x_in, w1_in, w2_col)

    return out.reshape(-1)[:B].reshape(B, 1)


def _forward_ktiled(x_in, w1_in, w2_col, B, d_in, H, block_b, budget,
                    in_bytes):
    # Shrink the batch tile until the f32 (H, block_b) accumulator (+ hidden
    # temporary in the finalize step) leaves room for the streamed K slabs.
    while block_b > 8 and 2 * H * block_b * 4 > (budget * 3) // 5:
        block_b = max(8, _round_up(block_b // 2, 8))
    # TODO(synk): for extremely large H (accumulator alone near the budget),
    # additionally chunk the hidden dimension inside the kernel.

    fixed = 2 * H * block_b * 4 + H * 4 + 2 * block_b * 4
    per_k = 2 * H * in_bytes + 2 * block_b * in_bytes  # double-buffered W1/X slabs
    tk = max(128, ((budget - fixed) // per_k) // 128 * 128)
    tk = min(tk, _round_up(d_in, 128))

    d_pad = _round_up(d_in, tk)
    b_pad = _round_up(B, block_b)
    x_in = jnp.pad(x_in, ((0, b_pad - B), (0, d_pad - d_in)))
    w1_in = jnp.pad(w1_in, ((0, 0), (0, d_pad - d_in)))
    num_tiles = b_pad // block_b
    num_k = d_pad // tk

    est = fixed + per_k * tk
    params = _compiler_params(("parallel", "arbitrary"), est, budget)

    def build(single_buffer_invariants):
        inv_kwargs = (dict(pipeline_mode=pl.Buffered(1))
                      if single_buffer_invariants else {})
        return pl.pallas_call(
            _fa_kernel_ktiled,
            out_shape=jax.ShapeDtypeStruct((num_tiles, 1, block_b), jnp.float32),
            grid_spec=pltpu.PrefetchScalarGridSpec(
                num_scalar_prefetch=0,
                grid=(num_tiles, num_k),
                in_specs=[
                    pl.BlockSpec((block_b, tk), lambda i, k: (i, k)),   # X slab
                    pl.BlockSpec((H, tk), lambda i, k: (0, k)),         # W1 slab
                    pl.BlockSpec((H, 1), lambda i, k: (0, 0), **inv_kwargs),
                ],
                out_specs=pl.BlockSpec((1, 1, block_b), lambda i, k: (i, 0, 0)),
                scratch_shapes=[pltpu.VMEM((H, block_b), jnp.float32)],
            ),
            compiler_params=params,
        )

    try:
        out = build(True)(x_in, w1_in, w2_col)
    except Exception:
        out = build(False)(x_in, w1_in, w2_col)

    return out.reshape(-1)[:B].reshape(B, 1)


def two_layer_fa_sigmoid_forward(x, w1, w2, *, block_b=None, use_bf16=None):
    """Fused forward pass of the two-layer feedback-alignment network.

    x:  (B, D_in) float32
    w1: (H, D_in) float32   (nn.Linear weight layout)
    w2: (1, H)    float32
    returns (B, 1) float32
    """
    B, d_in = x.shape
    H, d_in2 = w1.shape
    assert d_in == d_in2
    assert w2.shape == (1, H)

    # Fold 1/sqrt(H) into W2 once and lay it out as a column so the in-kernel
    # layer-2 reduction is a plain sublane reduce (no transpose).
    inv_sqrt_h = 1.0 / math.sqrt(H)
    w2_col = (w2.astype(jnp.float32) * jnp.float32(inv_sqrt_h)).reshape(H, 1)

    if use_bf16 is None:
        # Auto-enable for non-toy sizes: halves dominant W1/X HBM traffic and
        # feeds the MXU at native bf16 rate; accumulation stays f32.
        # (bf16 loosens accuracy to ~1e-2 rel; toy/test shapes stay f32.)
        use_bf16 = (H * d_in + B * d_in) * 4 >= (8 << 20)
    in_dtype = jnp.bfloat16 if use_bf16 else jnp.float32
    in_bytes = 2 if use_bf16 else 4
    x_in = x.astype(in_dtype)
    w1_in = w1.astype(in_dtype)

    budget = _vmem_budget_bytes()

    if block_b is None:
        block_b = _pick_batch_tile(B)
    block_b = max(8, _round_up(int(block_b), 8))     # (8,128) sublane rule
    block_b = min(block_b, _round_up(B, 8))          # never exceed padded batch

    # Per-batch-row VMEM cost on the resident-W1 path: X double-buffer,
    # f32 pre/hidden intermediates, output tile.
    per_row = 2 * d_in * in_bytes + 2 * H * 4 + 2 * 4
    fixed = H * d_in * in_bytes + H * 4               # single-buffered W1 + W2 col
    if fixed + 8 * per_row <= budget:
        max_b = max(8, ((budget - fixed) // per_row) // 8 * 8)
        block_b = min(block_b, max_b)
        return _forward_resident(x_in, w1_in, w2_col, B, d_in, H, block_b,
                                 budget, in_bytes)
    # W1 cannot stay resident within the (generation-dependent) VMEM budget:
    # stream it over a trailing "arbitrary" K grid axis.
    return _forward_ktiled(x_in, w1_in, w2_col, B, d_in, H, block_b,
                           budget, in_bytes)


def reference_forward(x, w1, w2):
    hidden = jax.nn.sigmoid(x @ w1.T)
    return (hidden @ w2.T) / math.sqrt(w1.shape[0])


if __name__ == "__main__":
    # Small shapes consistent with the module's forward pass.
    batch = 8
    input_features = 32
    hidden_features = 32

    key = jax.random.PRNGKey(0)
    kx, k1, k2 = jax.random.split(key, 3)

    x = jax.random.normal(kx, (batch, input_features), dtype=jnp.float32)
    w1 = jax.random.normal(k1, (hidden_features, input_features),
                           dtype=jnp.float32) / math.sqrt(input_features)
    w2 = jax.random.normal(k2, (1, hidden_features),
                           dtype=jnp.float32) / math.sqrt(hidden_features)

    out = jax.block_until_ready(two_layer_fa_sigmoid_forward(x, w1, w2))
    ref = reference_forward(x, w1, w2)

    assert out.shape == (batch, 1)
    assert jnp.allclose(out, ref, atol=1e-5, rtol=1e-5), (out, ref)

    print("KERNEL_OK")
</pallas_src>

<mosaic_0001>
module attributes {stable_mosaic.version = 11 : i64} {
  func.func @_fa_kernel_resident(%arg0: i32, %arg1: memref<8x32xf32, #tpu.memory_space<vmem>>, %arg2: memref<32x32xf32, #tpu.memory_space<vmem>>, %arg3: memref<32x1xf32, #tpu.memory_space<vmem>>, %arg4: memref<1x1x8xf32, #tpu.memory_space<vmem>>) attributes {dimension_semantics = [#tpu.dimension_semantics<parallel>], iteration_bounds = array<i64: 1>, scalar_prefetch = 0 : i64, scratch_operands = 0 : i64, tpu.core_type = #tpu.core_type<tc>, window_params = [{transform_indices = @transform_0, window_bounds = array<i64: 8, 32>}, {pipeline_mode = #tpu.pipeline_mode<synchronous>, transform_indices = @transform_1, window_bounds = array<i64: 32, 32>}, {pipeline_mode = #tpu.pipeline_mode<synchronous>, transform_indices = @transform_2, window_bounds = array<i64: 32, 1>}, {transform_indices = @transform_3, window_bounds = array<i64: 1, 1, 8>}]} {
    %c0 = arith.constant 0 : index
    %c0_0 = arith.constant 0 : index
    %0 = vector.load %arg2[%c0, %c0_0] : memref<32x32xf32, #tpu.memory_space<vmem>>, vector<32x32xf32>
    %c0_1 = arith.constant 0 : index
    %c0_2 = arith.constant 0 : index
    %1 = vector.load %arg1[%c0_1, %c0_2] : memref<8x32xf32, #tpu.memory_space<vmem>>, vector<8x32xf32>
    %cst = arith.constant dense<0.000000e+00> : vector<32x8xf32>
    %2 = tpu.matmul %0, %1, %cst {dimension_numbers = #tpu.dot_dimension_numbers<[1], [1], [0], [0], [0, 0, 1, 0], [], []>} : vector<32x32xf32>, vector<8x32xf32>, vector<32x8xf32> -> vector<32x8xf32>
    %cst_3 = arith.constant 5.000000e-01 : f32
    %3 = vector.broadcast %cst_3 : f32 to vector<32x8xf32>
    %4 = arith.mulf %3, %2 : vector<32x8xf32>
    %5 = math.tanh %4 : vector<32x8xf32>
    %cst_4 = arith.constant 5.000000e-01 : f32
    %6 = vector.broadcast %cst_4 : f32 to vector<32x8xf32>
    %7 = arith.mulf %6, %5 : vector<32x8xf32>
    %cst_5 = arith.constant 5.000000e-01 : f32
    %8 = vector.broadcast %cst_5 : f32 to vector<32x8xf32>
    %9 = arith.addf %7, %8 : vector<32x8xf32>
    %c0_6 = arith.constant 0 : index
    %c0_7 = arith.constant 0 : index
    %10 = vector.load %arg3[%c0_6, %c0_7] : memref<32x1xf32, #tpu.memory_space<vmem>>, vector<32x1xf32>
    %11 = vector.broadcast %10 : vector<32x1xf32> to vector<32x8xf32>
    %12 = arith.mulf %9, %11 : vector<32x8xf32>
    %cst_8 = arith.constant dense<0.000000e+00> : vector<8xf32>
    %13 = vector.multi_reduction <add>, %12, %cst_8 [0] : vector<32x8xf32> to vector<8xf32>
    %14 = vector.shape_cast %13 : vector<8xf32> to vector<1x8xf32>
    %15 = vector.shape_cast %14 : vector<1x8xf32> to vector<1x1x8xf32>
    %c0_9 = arith.constant 0 : index
    %c0_10 = arith.constant 0 : index
    %c0_11 = arith.constant 0 : index
    %16 = vector.load %arg4[%c0_9, %c0_10, %c0_11] : memref<1x1x8xf32, #tpu.memory_space<vmem>>, vector<1x1x8xf32>
    tpu.vector_store %arg4[%c0_9, %c0_10, %c0_11], %15 {strides = array<i32>} : memref<1x1x8xf32, #tpu.memory_space<vmem>>, vector<1x1x8xf32>,
    return
  }
  func.func @transform_0(%arg0: i32) -> (i32, i32) {
    %c0_i32 = arith.constant 0 : i32
    %c0_i32_0 = arith.constant 0 : i32
    return %arg0, %c0_i32 : i32, i32
  }
  func.func @transform_1(%arg0: i32) -> (i32, i32) {
    %c0_i32 = arith.constant 0 : i32
    %c0_i32_0 = arith.constant 0 : i32
    %c0_i32_1 = arith.constant 0 : i32
    return %c0_i32, %c0_i32_0 : i32, i32
  }
  func.func @transform_2(%arg0: i32) -> (i32, i32) {
    %c0_i32 = arith.constant 0 : i32
    %c0_i32_0 = arith.constant 0 : i32
    %c0_i32_1 = arith.constant 0 : i32
    return %c0_i32, %c0_i32_0 : i32, i32
  }
  func.func @transform_3(%arg0: i32) -> (i32, i32, i32) {
    %c0_i32 = arith.constant 0 : i32
    %c0_i32_0 = arith.constant 0 : i32
    %c0_i32_1 = arith.constant 0 : i32
    return %arg0, %c0_i32, %c0_i32_0 : i32, i32, i32
  }
}

module attributes {stable_mosaic.version = 11 : i64} {
  func.func @_fa_kernel_resident(%arg0: i32, %arg1: memref<8x32xf32, #tpu.memory_space<vmem>>, %arg2: memref<32x32xf32, #tpu.memory_space<vmem>>, %arg3: memref<32x1xf32, #tpu.memory_space<vmem>>, %arg4: memref<1x1x8xf32, #tpu.memory_space<vmem>>) attributes {dimension_semantics = [#tpu.dimension_semantics<parallel>], iteration_bounds = array<i64: 1>, scalar_prefetch = 0 : i64, scratch_operands = 0 : i64, tpu.core_type = #tpu.core_type<tc>, window_params = [{transform_indices = @transform_0, window_bounds = array<i64: 8, 32>}, {pipeline_mode = #tpu.pipeline_mode<synchronous>, transform_indices = @transform_1, window_bounds = array<i64: 32, 32>}, {pipeline_mode = #tpu.pipeline_mode<synchronous>, transform_indices = @transform_2, window_bounds = array<i64: 32, 1>}, {transform_indices = @transform_3, window_bounds = array<i64: 1, 1, 8>}]} {
    %c0 = arith.constant 0 : index
    %c0_0 = arith.constant 0 : index
    %0 = vector.load %arg2[%c0, %c0_0] : memref<32x32xf32, #tpu.memory_space<vmem>>, vector<32x32xf32>
    %c0_1 = arith.constant 0 : index
    %c0_2 = arith.constant 0 : index
    %1 = vector.load %arg1[%c0_1, %c0_2] : memref<8x32xf32, #tpu.memory_space<vmem>>, vector<8x32xf32>
    %cst = arith.constant dense<0.000000e+00> : vector<32x8xf32>
    %2 = tpu.matmul %0, %1, %cst {dimension_numbers = #tpu.dot_dimension_numbers<[1], [1], [0], [0], [0, 0, 1, 0], [], []>} : vector<32x32xf32>, vector<8x32xf32>, vector<32x8xf32> -> vector<32x8xf32>
    %cst_3 = arith.constant 5.000000e-01 : f32
    %3 = vector.broadcast %cst_3 : f32 to vector<32x8xf32>
    %4 = arith.mulf %3, %2 : vector<32x8xf32>
    %5 = math.tanh %4 : vector<32x8xf32>
    %cst_4 = arith.constant 5.000000e-01 : f32
    %6 = vector.broadcast %cst_4 : f32 to vector<32x8xf32>
    %7 = arith.mulf %6, %5 : vector<32x8xf32>
    %cst_5 = arith.constant 5.000000e-01 : f32
    %8 = vector.broadcast %cst_5 : f32 to vector<32x8xf32>
    %9 = arith.addf %7, %8 : vector<32x8xf32>
    %c0_6 = arith.constant 0 : index
    %c0_7 = arith.constant 0 : index
    %10 = vector.load %arg3[%c0_6, %c0_7] : memref<32x1xf32, #tpu.memory_space<vmem>>, vector<32x1xf32>
    %11 = vector.broadcast %10 : vector<32x1xf32> to vector<32x8xf32>
    %12 = arith.mulf %9, %11 : vector<32x8xf32>
    %cst_8 = arith.constant dense<0.000000e+00> : vector<8xf32>
    %13 = vector.multi_reduction <add>, %12, %cst_8 [0] : vector<32x8xf32> to vector<8xf32>
    %14 = vector.shape_cast %13 : vector<8xf32> to vector<1x8xf32>
    %15 = vector.shape_cast %14 : vector<1x8xf32> to vector<1x1x8xf32>
    %c0_9 = arith.constant 0 : index
    %c0_10 = arith.constant 0 : index
    %c0_11 = arith.constant 0 : index
    %16 = vector.load %arg4[%c0_9, %c0_10, %c0_11] : memref<1x1x8xf32, #tpu.memory_space<vmem>>, vector<1x1x8xf32>
    tpu.vector_store %arg4[%c0_9, %c0_10, %c0_11], %15 {strides = array<i32>} : memref<1x1x8xf32, #tpu.memory_space<vmem>>, vector<1x1x8xf32>,
    return
  }
  func.func @transform_0(%arg0: i32) -> (i32, i32) {
    %c0_i32 = arith.constant 0 : i32
    %c0_i32_0 = arith.constant 0 : i32
    return %arg0, %c0_i32 : i32, i32
  }
  func.func @transform_1(%arg0: i32) -> (i32, i32) {
    %c0_i32 = arith.constant 0 : i32
    %c0_i32_0 = arith.constant 0 : i32
    %c0_i32_1 = arith.constant 0 : i32
    return %c0_i32, %c0_i32_0 : i32, i32
  }
  func.func @transform_2(%arg0: i32) -> (i32, i32) {
    %c0_i32 = arith.constant 0 : i32
    %c0_i32_0 = arith.constant 0 : i32
    %c0_i32_1 = arith.constant 0 : i32
    return %c0_i32, %c0_i32_0 : i32, i32
  }
  func.func @transform_3(%arg0: i32) -> (i32, i32, i32) {
    %c0_i32 = arith.constant 0 : i32
    %c0_i32_0 = arith.constant 0 : i32
    %c0_i32_1 = arith.constant 0 : i32
    return %arg0, %c0_i32, %c0_i32_0 : i32, i32, i32
  }
}

</mosaic_0001>

<llo_original>
// kernel: tpu_custom_call.1
$region0: #{tpu_custom_call.1}
  #allocation0 [shape = 'u32[]', space=smem, size = 0x4, offset = 0x4, fixed_abs, tag = 'smem constant byte address 0x4 - core index']
  #allocation1 [shape = 'u32[72,128]{1,0:T(1,128)}', space=vmem, size = 0x9000, scoped, tag = 'internal scratch']
  %s0 = inlined_call_operand.hbm [shape: f32[8,32], index: 0, kind: input, shape index: {}]
  %s1 = inlined_call_operand.vmem [shape: f32[32,32], index: 1, kind: input, shape index: {}]
  %s2 = inlined_call_operand.vmem [shape: f32[32,1], index: 2, kind: input, shape index: {}]
  %s3 = inlined_call_operand.hbm [shape: f32[1,1,8], index: 3, kind: output, shape index: {}]
  %s4 = sld [smem:[#allocation0]]
  $region26: #{tpu_custom_call.1} parent=0
    _
  %s6 = ssub.s32 1, %s4
  %s7 = scalar_select 0, %s6, %s4
  $region1: #{tpu_custom_call.1} parent=0
    #allocation2 [shape = 'u8[4096]{0}', space=vmem, size = 0x1000, scoped, tag = 'input window, operand 0, single buffered']
    #allocation3 [shape = 's32[1]{0}', space=sflag, size = 0x4, scoped, tag = 'scoped memory for tpu_custom_call.1']
    #allocation4 [shape = 's32[1]{0}', space=sflag, size = 0x4, scoped, tag = 'scoped memory for tpu_custom_call.1']
    #allocation5 [shape = 'u8[512]{0}', space=vmem, size = 0x400, scoped, tag = 'output window, operand 0, single buffered']
    %8 = vsyncpa [#allocation3], 0
    %9 = vsyncpa [#allocation4], 0
    // Predicated region
    $region2: #{tpu_custom_call.1} parent=1 // pred_check
      _
    $region3: #{tpu_custom_call.1} parent=1 // pred_check_branch
      %11 = sbr.rel (0) target = $region5
    $region4: #{tpu_custom_call.1} parent=1 // pred_region
      %13 = vsyncadd [#allocation3], 0
      %s15 = sshll.u32 %s0, 4
      %s16 = int_to_ptr.hbm [resolvable:$true] %s15
      %s17 = sshll.u32 [#allocation2], 4
      %s18 = int_to_ptr.vmem [resolvable:$true] %s17
      %20 = dma.hbm_to_vmem [thread:$0]  %s16, 128, %s18, [#allocation3]
    $region5: #{tpu_custom_call.1} parent=1 // pred_fallthru
      _
    // Predicated region
    $region6: #{tpu_custom_call.1} parent=1 // pred_check
      _
    $region7: #{tpu_custom_call.1} parent=1 // pred_check_branch
      %22 = sbr.rel (0) target = $region9
    $region8: #{tpu_custom_call.1} parent=1 // pred_region
      _
    $region9: #{tpu_custom_call.1} parent=1 // pred_fallthru
      _
    // Predicated region
    $region10: #{tpu_custom_call.1} parent=1 // pred_check
      _
    $region11: #{tpu_custom_call.1} parent=1 // pred_check_branch
      %24 = sbr.rel (0) target = $region13
    $region12: #{tpu_custom_call.1} parent=1 // pred_region
      _
    $region13: #{tpu_custom_call.1} parent=1 // pred_fallthru
      _
    // Predicated region
    $region14: #{tpu_custom_call.1} parent=1 // pred_check
      _
    $region15: #{tpu_custom_call.1} parent=1 // pred_check_branch
      %26 = sbr.rel (0) target = $region17
    $region16: #{tpu_custom_call.1} parent=1 // pred_region
      %28 = dma.done [#allocation3], 128
    $region17: #{tpu_custom_call.1} parent=1 // pred_fallthru
      _
    %v29 = vld [vmem:[%s1] sm:$0xff]
    %v30 = vld [vmem:[%s1 + $0x8] sm:$0xff]
    %v31 = vld [vmem:[%s1 + $0x10] sm:$0xff]
    %v32 = vld [vmem:[%s1 + $0x18] sm:$0xff]
    %v33 = vld [vmem:[#allocation2] sm:$0xff]
    %vm34 = vcmask 261120
    %v36 = vsel %vm34, %v29, 0
    %v39 = vsel %vm34, %v30, 0
    %v42 = vsel %vm34, %v31, 0
    %v45 = vsel %vm34, %v32, 0
    %v48 = vsel %vm34, %v33, 0
    %50 = vmatpush.xpose.msra.mxu0 0.0
    %51 = vmatpush.xpose.msra.mxu0 0.0
    %52 = vmatpush.xpose.msra.mxu0 0.0
    %53 = vmatpush.xpose.msra.mxu0 0.0
    %54 = vmatpush.xpose.msra.mxu0 0.0
    %55 = vmatpush.xpose.msra.mxu0 0.0
    %56 = vmatpush.xpose.msra.mxu0 0.0
    %57 = vmatpush.xpose.msra.mxu0 0.0
    %58 = vmatpush.xpose.msra.mxu0 0.0
    %59 = vmatpush.xpose.msra.mxu0 0.0
    %60 = vmatpush.xpose.msra.mxu0 0.0
    %61 = vmatpush.xpose.msra.mxu0 0.0
    %62 = vmatpush.xpose.msra.mxu0 0.0
    %63 = vmatpush.xpose.msra.mxu0 0.0
    %64 = vmatpush.xpose.msra.mxu0 0.0
    %65 = vmatpush.xpose.msra.mxu0 %v48
    %66 = vmatmul.f32.gmra.mxu0 %v36
    %v67 = vpop.f32.mrf.mxu0
    %v68 = vadd.f32 0.0, %v67
    %69 = vmatmul.f32.gmra.mxu0 %v39
    %v70 = vpop.f32.mrf.mxu0
    %v71 = vadd.f32 0.0, %v70
    %72 = vmatmul.f32.gmra.mxu0 %v42
    %v73 = vpop.f32.mrf.mxu0
    %v74 = vadd.f32 0.0, %v73
    %75 = vmatmul.f32.gmra.mxu0 %v45
    %v76 = vpop.f32.mrf.mxu0
    %v77 = vadd.f32 0.0, %v76
    %78 = vdwg.mxu0
    %v79 = vmul.f32 %v68, 0.5
    %v80 = vmul.f32 %v71, 0.5
    %v81 = vmul.f32 %v74, 0.5
    %v82 = vmul.f32 %v77, 0.5
    %v83 = vtanh.pop %v79
    %v84 = vtanh.pop %v80
    %v85 = vtanh.pop %v81
    %v86 = vtanh.pop %v82
    %v87 = vmul.f32 %v83, 0.5
    %v88 = vmul.f32 %v84, 0.5
    %v89 = vmul.f32 %v85, 0.5
    %v90 = vmul.f32 %v86, 0.5
    %v91 = vadd.f32 %v87, 0.5
    %v92 = vadd.f32 %v88, 0.5
    %v93 = vadd.f32 %v89, 0.5
    %v94 = vadd.f32 %v90, 0.5
    %v95 = vld [vmem:[%s2] sm:$0xff]
    %v96 = vld [vmem:[%s2 + $0x8] sm:$0xff]
    %v97 = vld [vmem:[%s2 + $0x10] sm:$0xff]
    %v98 = vld [vmem:[%s2 + $0x18] sm:$0xff]
    %100 = vset.pattern.permute.xlu0 0
    %101 = vperm.xlu0 %100, %v95
    %v102 = vpop.permute.xlu0 %101
    %105 = vset.pattern.permute.xlu0 0
    %106 = vperm.xlu0 %105, %v96
    %v107 = vpop.permute.xlu0 %106
    %110 = vset.pattern.permute.xlu0 0
    %111 = vperm.xlu0 %110, %v97
    %v112 = vpop.permute.xlu0 %111
    %115 = vset.pattern.permute.xlu0 0
    %116 = vperm.xlu0 %115, %v98
    %v117 = vpop.permute.xlu0 %116
    %v119 = vmul.f32 %v91, %v102
    %v120 = vmul.f32 %v92, %v107
    %v121 = vmul.f32 %v93, %v112
    %v122 = vmul.f32 %v94, %v117
    %vm123 = vcmask 64512
    %v124 = vsel %vm123, %v119, 0.0
    %v125 = vsel %vm123, %v120, 0.0
    %v126 = vadd.f32 %v124, %v125
    %v127 = vsel %vm123, %v121, 0.0
    %v128 = vadd.f32 %v126, %v127
    %v129 = vsel %vm123, %v122, 0.0
    %v130 = vadd.f32 %v128, %v129
    %v131 = vrot.slane %v130, 4
    %v132 = vadd.f32 %v130, %v131
    %v133 = vrot.slane %v132, 2
    %v134 = vadd.f32 %v132, %v133
    %v135 = vrot.slane %v134, 1
    %v136 = vadd.f32 %v134, %v135
    %vm137 = vcmask 57344
    %138 = vst.msk [vmem:[#allocation5] sm:$0x1] %vm137, %v136
    // Predicated region
    $region18: #{tpu_custom_call.1} parent=1 // pred_check
      _
    $region19: #{tpu_custom_call.1} parent=1 // pred_check_branch
      %140 = sbr.rel (0) target = $region21
    $region20: #{tpu_custom_call.1} parent=1 // pred_region
      %142 = vsyncadd [#allocation4], 0
      %s144 = sshll.u32 [#allocation5], 4
      %s145 = int_to_ptr.vmem [resolvable:$true] %s144
      %s146 = sshll.u32 %s3, 4
      %s147 = int_to_ptr.hbm [resolvable:$true] %s146
      %149 = dma.vmem_to_hbm [thread:$0]  %s145, 16, %s147, [#allocation4]
    $region21: #{tpu_custom_call.1} parent=1 // pred_fallthru
      _
    // Predicated region
    $region22: #{tpu_custom_call.1} parent=1 // pred_check
      _
    $region23: #{tpu_custom_call.1} parent=1 // pred_check_branch
      %151 = sbr.rel (0) target = $region25
    $region24: #{tpu_custom_call.1} parent=1 // pred_region
      %153 = dma.done [#allocation4], 16
    $region25: #{tpu_custom_call.1} parent=1 // pred_fallthru
      _
    %154 = vsyncpa [#allocation3], 1
    %155 = vsyncpa [#allocation4], 1

// kernel: tpu_custom_call.1
$region0: #{tpu_custom_call.1}
  #allocation0 [shape = 'u32[]', space=smem, size = 0x4, offset = 0x4, fixed_abs, tag = 'smem constant byte address 0x4 - core index']
  #allocation1 [shape = 'u32[72,128]{1,0:T(1,128)}', space=vmem, size = 0x9000, scoped, tag = 'internal scratch']
  %s0 = inlined_call_operand.hbm [shape: f32[8,32], index: 0, kind: input, shape index: {}]
  %s1 = inlined_call_operand.vmem [shape: f32[32,32], index: 1, kind: input, shape index: {}]
  %s2 = inlined_call_operand.vmem [shape: f32[32,1], index: 2, kind: input, shape index: {}]
  %s3 = inlined_call_operand.hbm [shape: f32[1,1,8], index: 3, kind: output, shape index: {}]
  %s4 = sld [smem:[#allocation0]]
  $region26: #{tpu_custom_call.1} parent=0
    _
  %s6 = ssub.s32 1, %s4
  %s7 = scalar_select 0, %s6, %s4
  $region1: #{tpu_custom_call.1} parent=0
    #allocation2 [shape = 'u8[4096]{0}', space=vmem, size = 0x1000, scoped, tag = 'input window, operand 0, single buffered']
    #allocation3 [shape = 's32[1]{0}', space=sflag, size = 0x4, scoped, tag = 'scoped memory for tpu_custom_call.1']
    #allocation4 [shape = 's32[1]{0}', space=sflag, size = 0x4, scoped, tag = 'scoped memory for tpu_custom_call.1']
    #allocation5 [shape = 'u8[512]{0}', space=vmem, size = 0x400, scoped, tag = 'output window, operand 0, single buffered']
    %8 = vsyncpa [#allocation3], 0
    %9 = vsyncpa [#allocation4], 0
    // Predicated region
    $region2: #{tpu_custom_call.1} parent=1 // pred_check
      _
    $region3: #{tpu_custom_call.1} parent=1 // pred_check_branch
      %11 = sbr.rel (0) target = $region5
    $region4: #{tpu_custom_call.1} parent=1 // pred_region
      %13 = vsyncadd [#allocation3], 0
      %s15 = sshll.u32 %s0, 4
      %s16 = int_to_ptr.hbm [resolvable:$true] %s15
      %s17 = sshll.u32 [#allocation2], 4
      %s18 = int_to_ptr.vmem [resolvable:$true] %s17
      %20 = dma.hbm_to_vmem [thread:$0]  %s16, 128, %s18, [#allocation3]
    $region5: #{tpu_custom_call.1} parent=1 // pred_fallthru
      _
    // Predicated region
    $region6: #{tpu_custom_call.1} parent=1 // pred_check
      _
    $region7: #{tpu_custom_call.1} parent=1 // pred_check_branch
      %22 = sbr.rel (0) target = $region9
    $region8: #{tpu_custom_call.1} parent=1 // pred_region
      _
    $region9: #{tpu_custom_call.1} parent=1 // pred_fallthru
      _
    // Predicated region
    $region10: #{tpu_custom_call.1} parent=1 // pred_check
      _
    $region11: #{tpu_custom_call.1} parent=1 // pred_check_branch
      %24 = sbr.rel (0) target = $region13
    $region12: #{tpu_custom_call.1} parent=1 // pred_region
      _
    $region13: #{tpu_custom_call.1} parent=1 // pred_fallthru
      _
    // Predicated region
    $region14: #{tpu_custom_call.1} parent=1 // pred_check
      _
    $region15: #{tpu_custom_call.1} parent=1 // pred_check_branch
      %26 = sbr.rel (0) target = $region17
    $region16: #{tpu_custom_call.1} parent=1 // pred_region
      %28 = dma.done [#allocation3], 128
    $region17: #{tpu_custom_call.1} parent=1 // pred_fallthru
      _
    %v29 = vld [vmem:[%s1] sm:$0xff]
    %v30 = vld [vmem:[%s1 + $0x8] sm:$0xff]
    %v31 = vld [vmem:[%s1 + $0x10] sm:$0xff]
    %v32 = vld [vmem:[%s1 + $0x18] sm:$0xff]
    %v33 = vld [vmem:[#allocation2] sm:$0xff]
    %vm34 = vcmask 261120
    %v36 = vsel %vm34, %v29, 0
    %v39 = vsel %vm34, %v30, 0
    %v42 = vsel %vm34, %v31, 0
    %v45 = vsel %vm34, %v32, 0
    %v48 = vsel %vm34, %v33, 0
    %50 = vmatpush.xpose.msra.mxu0 0.0
    %51 = vmatpush.xpose.msra.mxu0 0.0
    %52 = vmatpush.xpose.msra.mxu0 0.0
    %53 = vmatpush.xpose.msra.mxu0 0.0
    %54 = vmatpush.xpose.msra.mxu0 0.0
    %55 = vmatpush.xpose.msra.mxu0 0.0
    %56 = vmatpush.xpose.msra.mxu0 0.0
    %57 = vmatpush.xpose.msra.mxu0 0.0
    %58 = vmatpush.xpose.msra.mxu0 0.0
    %59 = vmatpush.xpose.msra.mxu0 0.0
    %60 = vmatpush.xpose.msra.mxu0 0.0
    %61 = vmatpush.xpose.msra.mxu0 0.0
    %62 = vmatpush.xpose.msra.mxu0 0.0
    %63 = vmatpush.xpose.msra.mxu0 0.0
    %64 = vmatpush.xpose.msra.mxu0 0.0
    %65 = vmatpush.xpose.msra.mxu0 %v48
    %66 = vmatmul.f32.gmra.mxu0 %v36
    %v67 = vpop.f32.mrf.mxu0
    %v68 = vadd.f32 0.0, %v67
    %69 = vmatmul.f32.gmra.mxu0 %v39
    %v70 = vpop.f32.mrf.mxu0
    %v71 = vadd.f32 0.0, %v70
    %72 = vmatmul.f32.gmra.mxu0 %v42
    %v73 = vpop.f32.mrf.mxu0
    %v74 = vadd.f32 0.0, %v73
    %75 = vmatmul.f32.gmra.mxu0 %v45
    %v76 = vpop.f32.mrf.mxu0
    %v77 = vadd.f32 0.0, %v76
    %78 = vdwg.mxu0
    %v79 = vmul.f32 %v68, 0.5
    %v80 = vmul.f32 %v71, 0.5
    %v81 = vmul.f32 %v74, 0.5
    %v82 = vmul.f32 %v77, 0.5
    %v83 = vtanh.pop %v79
    %v84 = vtanh.pop %v80
    %v85 = vtanh.pop %v81
    %v86 = vtanh.pop %v82
    %v87 = vmul.f32 %v83, 0.5
    %v88 = vmul.f32 %v84, 0.5
    %v89 = vmul.f32 %v85, 0.5
    %v90 = vmul.f32 %v86, 0.5
    %v91 = vadd.f32 %v87, 0.5
    %v92 = vadd.f32 %v88, 0.5
    %v93 = vadd.f32 %v89, 0.5
    %v94 = vadd.f32 %v90, 0.5
    %v95 = vld [vmem:[%s2] sm:$0xff]
    %v96 = vld [vmem:[%s2 + $0x8] sm:$0xff]
    %v97 = vld [vmem:[%s2 + $0x10] sm:$0xff]
    %v98 = vld [vmem:[%s2 + $0x18] sm:$0xff]
    %100 = vset.pattern.permute.xlu0 0
    %101 = vperm.xlu0 %100, %v95
    %v102 = vpop.permute.xlu0 %101
    %105 = vset.pattern.permute.xlu0 0
    %106 = vperm.xlu0 %105, %v96
    %v107 = vpop.permute.xlu0 %106
    %110 = vset.pattern.permute.xlu0 0
    %111 = vperm.xlu0 %110, %v97
    %v112 = vpop.permute.xlu0 %111
    %115 = vset.pattern.permute.xlu0 0
    %116 = vperm.xlu0 %115, %v98
    %v117 = vpop.permute.xlu0 %116
    %v119 = vmul.f32 %v91, %v102
    %v120 = vmul.f32 %v92, %v107
    %v121 = vmul.f32 %v93, %v112
    %v122 = vmul.f32 %v94, %v117
    %vm123 = vcmask 64512
    %v124 = vsel %vm123, %v119, 0.0
    %v125 = vsel %vm123, %v120, 0.0
    %v126 = vadd.f32 %v124, %v125
    %v127 = vsel %vm123, %v121, 0.0
    %v128 = vadd.f32 %v126, %v127
    %v129 = vsel %vm123, %v122, 0.0
    %v130 = vadd.f32 %v128, %v129
    %v131 = vrot.slane %v130, 4
    %v132 = vadd.f32 %v130, %v131
    %v133 = vrot.slane %v132, 2
    %v134 = vadd.f32 %v132, %v133
    %v135 = vrot.slane %v134, 1
    %v136 = vadd.f32 %v134, %v135
    %vm137 = vcmask 57344
    %138 = vst.msk [vmem:[#allocation5] sm:$0x1] %vm137, %v136
    // Predicated region
    $region18: #{tpu_custom_call.1} parent=1 // pred_check
      _
    $region19: #{tpu_custom_call.1} parent=1 // pred_check_branch
      %140 = sbr.rel (0) target = $region21
    $region20: #{tpu_custom_call.1} parent=1 // pred_region
      %142 = vsyncadd [#allocation4], 0
      %s144 = sshll.u32 [#allocation5], 4
      %s145 = int_to_ptr.vmem [resolvable:$true] %s144
      %s146 = sshll.u32 %s3, 4
      %s147 = int_to_ptr.hbm [resolvable:$true] %s146
      %149 = dma.vmem_to_hbm [thread:$0]  %s145, 16, %s147, [#allocation4]
    $region21: #{tpu_custom_call.1} parent=1 // pred_fallthru
      _
    // Predicated region
    $region22: #{tpu_custom_call.1} parent=1 // pred_check
      _
    $region23: #{tpu_custom_call.1} parent=1 // pred_check_branch
      %151 = sbr.rel (0) target = $region25
    $region24: #{tpu_custom_call.1} parent=1 // pred_region
      %153 = dma.done [#allocation4], 16
    $region25: #{tpu_custom_call.1} parent=1 // pred_fallthru
      _
    %154 = vsyncpa [#allocation3], 1
    %155 = vsyncpa [#allocation4], 1

</llo_original>
